<compile_context>
chip_gen: v7x
topology: tpu7x:2x2x1
jax: 0.10.0
libtpu: 0.0.40
codegen_flags: <defaults>
</compile_context>

<pallas_src>
import functools

import jax
import jax.numpy as jnp
from jax.experimental import pallas as pl
from jax.experimental.pallas import tpu as pltpu

IMAGE_SIZE = 64          # small stand-in for neural_renderer's default 256
LANES = 128              # lane-dense compute width


# ----------------------------- Pallas kernel --------------------------------
def render_silhouette_loss(coef_flat, image_ref):
    """coef_flat: (F*9,) f32 edge coefficients (A0,B0,C0,A1,B1,C1,A2,B2,C2)/face
       image_ref: (H, W) f32 binary reference silhouette
       returns (image (H, W) f32, loss scalar f32)"""
    H, W = image_ref.shape
    assert (W & (W - 1)) == 0 and W <= LANES and LANES % W == 0
    assert (H * W) % LANES == 0
    R = (H * W) // LANES
    rows_per_vrow = LANES // W          # image rows packed per 128-lane row
    w_shift = W.bit_length() - 1        # log2(W): div/mod -> shift/mask
    num_faces = coef_flat.shape[0] // 9
    ref_flat = image_ref.reshape(R, LANES)

    def kernel(coef_ref, ref_ref, img_ref, loss_ref):
        # lane-dense pixel coordinates from sublane/lane iotas (shift/mask only)
        row = jax.lax.broadcasted_iota(jnp.int32, (R, LANES), 0)
        lane = jax.lax.broadcasted_iota(jnp.int32, (R, LANES), 1)
        yy = (row * rows_per_vrow + (lane >> w_shift)).astype(jnp.float32)
        xx = (lane & (W - 1)).astype(jnp.float32)

        # f32 coverage accumulator: acc = max over faces of min(e0,e1,e2);
        # a pixel is covered iff acc >= 0.  -inf init => empty coverage stays 0.
        acc = jnp.full((R, LANES), -jnp.inf, jnp.float32)
        # static face count -> fully unrolled; scalar SMEM reads co-issue with
        # the previous face's vector work.
        for f in range(num_faces):
            b = 9 * f
            a0 = coef_ref[b + 0]; b0 = coef_ref[b + 1]; c0 = coef_ref[b + 2]
            a1 = coef_ref[b + 3]; b1 = coef_ref[b + 4]; c1 = coef_ref[b + 5]
            a2 = coef_ref[b + 6]; b2 = coef_ref[b + 7]; c2 = coef_ref[b + 8]
            e0 = a0 * yy + b0 * xx + c0
            e1 = a1 * yy + b1 * xx + c1
            e2 = a2 * yy + b2 * xx + c2
            m = jnp.minimum(jnp.minimum(e0, e1), e2)
            acc = jnp.maximum(acc, m)

        covf = (acc >= 0.0).astype(jnp.float32)
        img_ref[...] = covf
        diff = covf - ref_ref[...]
        loss_ref[0] = jnp.sum(diff * diff)

    img, loss = pl.pallas_call(
        kernel,
        out_shape=(jax.ShapeDtypeStruct((R, LANES), jnp.float32),
                   jax.ShapeDtypeStruct((1,), jnp.float32)),
        in_specs=[
            pl.BlockSpec(memory_space=pltpu.MemorySpace.SMEM),   # face coefs
            pl.BlockSpec(memory_space=pltpu.MemorySpace.VMEM),   # reference
        ],
        out_specs=(
            pl.BlockSpec(memory_space=pltpu.MemorySpace.VMEM),   # image
            pl.BlockSpec(memory_space=pltpu.MemorySpace.SMEM),   # loss scalar
        ),
    )(coef_flat, ref_flat)
    return img.reshape(H, W), loss[0]


# --------------------------- JAX glue (projection) ---------------------------
def look_at(vertices, eye):
    # neural_renderer.look_at: at = origin, up = +y
    at = jnp.zeros(3, jnp.float32)
    up = jnp.array([0.0, 1.0, 0.0], jnp.float32)
    z = at - eye
    z = z / jnp.linalg.norm(z)
    x = jnp.cross(up, z)
    x = x / jnp.linalg.norm(x)
    y = jnp.cross(z, x)
    y = y / jnp.linalg.norm(y)
    R = jnp.stack([x, y, z], axis=0)          # (3, 3)
    return (vertices - eye[None, :]) @ R.T


def perspective(vertices, angle_deg=30.0):
    # neural_renderer.perspective
    width = jnp.tan(jnp.deg2rad(jnp.float32(angle_deg)))
    z = vertices[:, 2]
    x = vertices[:, 0] / z / width
    y = vertices[:, 1] / z / width
    return jnp.stack([x, y, z], axis=1)


def face_edge_coeffs(vertices, faces, camera_position, image_size):
    """Project faces to pixel space and build orientation-normalized edge
    coefficients: e_k(x, y) = A_k*y + B_k*x + C_k, pre-multiplied by
    sign(area) so inside == all e_k >= 0.  Degenerate faces are rewritten so
    they never pass the inside test (min(e) = -1 < 0)."""
    v_cam = look_at(vertices, camera_position)
    v_ndc = perspective(v_cam)
    px = (v_ndc[:, 0] + 1.0) * 0.5 * (image_size - 1)
    py = (1.0 - v_ndc[:, 1]) * 0.5 * (image_size - 1)   # flip y: row 0 = top
    pix = jnp.stack([px, py], axis=1)                   # (V, 2)
    tri = pix[faces]                                    # (F, 3, 2)
    x0, y0 = tri[:, 0, 0], tri[:, 0, 1]
    x1, y1 = tri[:, 1, 0], tri[:, 1, 1]
    x2, y2 = tri[:, 2, 0], tri[:, 2, 1]

    def edge(xa, ya, xb, yb):
        A = xb - xa
        B = -(yb - ya)
        C = -(A * ya + B * xa)
        return A, B, C

    A0, B0, C0 = edge(x0, y0, x1, y1)
    A1, B1, C1 = edge(x1, y1, x2, y2)
    A2, B2, C2 = edge(x2, y2, x0, y0)

    area = (x1 - x0) * (y2 - y0) - (y1 - y0) * (x2 - x0)
    s = jnp.sign(area)
    valid = jnp.abs(area) > 1e-8

    def norm(A, B, C):
        A = jnp.where(valid, s * A, 0.0)
        B = jnp.where(valid, s * B, 0.0)
        C = jnp.where(valid, s * C, -1.0)   # degenerate face -> always outside
        return A, B, C

    A0, B0, C0 = norm(A0, B0, C0)
    A1, B1, C1 = norm(A1, B1, C1)
    A2, B2, C2 = norm(A2, B2, C2)
    coefs = jnp.stack([A0, B0, C0, A1, B1, C1, A2, B2, C2], axis=1)  # (F, 9)
    return coefs.reshape(-1).astype(jnp.float32)                    # 1D SMEM layout


@jax.jit
def forward(vertices, faces, camera_position, image_ref):
    # One fused executable: projection math + pallas render + loss.
    coef_flat = face_edge_coeffs(vertices, faces, camera_position,
                                 image_ref.shape[0])
    image, loss = render_silhouette_loss(coef_flat, image_ref)
    return image, loss


def make_cube(scale=3.0):
    # deterministic stand-in for nr.load_obj(filename_obj)
    v = jnp.array([[-1, -1, -1], [1, -1, -1], [1, 1, -1], [-1, 1, -1],
                   [-1, -1,  1], [1, -1,  1], [1, 1,  1], [-1, 1,  1]],
                  jnp.float32) * scale
    f = jnp.array([[0, 1, 2], [0, 2, 3], [4, 6, 5], [4, 7, 6],
                   [0, 4, 5], [0, 5, 1], [3, 2, 6], [3, 6, 7],
                   [0, 3, 7], [0, 7, 4], [1, 5, 6], [1, 6, 2]], jnp.int32)
    return v, f


# ------------------------------------ main -----------------------------------
if __name__ == "__main__":
    key = jax.random.PRNGKey(0)

    # mesh buffers (deterministic; small jitter to exercise arbitrary geometry)
    vertices, faces = make_cube(scale=3.0)
    vertices = vertices + 0.05 * jax.random.normal(key, vertices.shape, jnp.float32)

    # nn.Parameter camera_position = [6, 10, -14] (same as the PyTorch module)
    camera_position = jnp.array([6.0, 10.0, -14.0], jnp.float32)

    # synthetic binary reference silhouette (stand-in for imread(...).max(-1) != 0)
    yy, xx = jnp.meshgrid(jnp.arange(IMAGE_SIZE, dtype=jnp.float32),
                          jnp.arange(IMAGE_SIZE, dtype=jnp.float32), indexing="ij")
    c = (IMAGE_SIZE - 1) / 2.0
    image_ref = (((yy - c) ** 2 + (xx - c) ** 2) < 12.0 ** 2).astype(jnp.float32)

    # TODO(synk): neural_renderer's anti-aliased / gradient-carrying rasterizer is
    # not reproduced; forward silhouette = hard per-pixel triangle coverage.
    image, loss = forward(vertices, faces, camera_position, image_ref)

    jax.block_until_ready(loss)
    print("KERNEL_OK")
</pallas_src>

<mosaic_0001>
module attributes {stable_mosaic.version = 11 : i64} {
  func.func @kernel(%arg0: memref<108xf32, #tpu.memory_space<smem>>, %arg1: memref<32x128xf32, #tpu.memory_space<vmem>>, %arg2: memref<32x128xf32, #tpu.memory_space<vmem>>, %arg3: memref<1xf32, #tpu.memory_space<smem>>) attributes {dimension_semantics = [], scalar_prefetch = 0 : i64, scratch_operands = 0 : i64, tpu.core_type = #tpu.core_type<tc>} {
    %0 = tpu.iota {dimensions = array<i32: 0>} : vector<32x128xi32>
    %1 = tpu.iota {dimensions = array<i32: 1>} : vector<32x128xi32>
    %c2_i32 = arith.constant 2 : i32
    %2 = vector.broadcast %c2_i32 : i32 to vector<32x128xi32>
    %3 = arith.muli %0, %2 : vector<32x128xi32>
    %c6_i32 = arith.constant 6 : i32
    %4 = vector.broadcast %c6_i32 : i32 to vector<32x128xi32>
    %5 = arith.shrsi %1, %4 : vector<32x128xi32>
    %6 = arith.addi %3, %5 : vector<32x128xi32>
    %7 = arith.sitofp %6 : vector<32x128xi32> to vector<32x128xf32>
    %c63_i32 = arith.constant 63 : i32
    %8 = vector.broadcast %c63_i32 : i32 to vector<32x128xi32>
    %9 = arith.andi %1, %8 : vector<32x128xi32>
    %10 = arith.sitofp %9 : vector<32x128xi32> to vector<32x128xf32>
    %cst = arith.constant 0xFF800000 : f32
    %11 = vector.broadcast %cst : f32 to vector<32x128xf32>
    %c0 = arith.constant 0 : index
    %12 = memref.load %arg0[%c0] : memref<108xf32, #tpu.memory_space<smem>>
    %c1 = arith.constant 1 : index
    %13 = memref.load %arg0[%c1] : memref<108xf32, #tpu.memory_space<smem>>
    %c2 = arith.constant 2 : index
    %14 = memref.load %arg0[%c2] : memref<108xf32, #tpu.memory_space<smem>>
    %c3 = arith.constant 3 : index
    %15 = memref.load %arg0[%c3] : memref<108xf32, #tpu.memory_space<smem>>
    %c4 = arith.constant 4 : index
    %16 = memref.load %arg0[%c4] : memref<108xf32, #tpu.memory_space<smem>>
    %c5 = arith.constant 5 : index
    %17 = memref.load %arg0[%c5] : memref<108xf32, #tpu.memory_space<smem>>
    %c6 = arith.constant 6 : index
    %18 = memref.load %arg0[%c6] : memref<108xf32, #tpu.memory_space<smem>>
    %c7 = arith.constant 7 : index
    %19 = memref.load %arg0[%c7] : memref<108xf32, #tpu.memory_space<smem>>
    %c8 = arith.constant 8 : index
    %20 = memref.load %arg0[%c8] : memref<108xf32, #tpu.memory_space<smem>>
    %21 = vector.broadcast %12 : f32 to vector<32x128xf32>
    %22 = arith.mulf %21, %7 : vector<32x128xf32>
    %23 = vector.broadcast %13 : f32 to vector<32x128xf32>
    %24 = arith.mulf %23, %10 : vector<32x128xf32>
    %25 = arith.addf %22, %24 : vector<32x128xf32>
    %26 = vector.broadcast %14 : f32 to vector<32x128xf32>
    %27 = arith.addf %25, %26 : vector<32x128xf32>
    %28 = vector.broadcast %15 : f32 to vector<32x128xf32>
    %29 = arith.mulf %28, %7 : vector<32x128xf32>
    %30 = vector.broadcast %16 : f32 to vector<32x128xf32>
    %31 = arith.mulf %30, %10 : vector<32x128xf32>
    %32 = arith.addf %29, %31 : vector<32x128xf32>
    %33 = vector.broadcast %17 : f32 to vector<32x128xf32>
    %34 = arith.addf %32, %33 : vector<32x128xf32>
    %35 = vector.broadcast %18 : f32 to vector<32x128xf32>
    %36 = arith.mulf %35, %7 : vector<32x128xf32>
    %37 = vector.broadcast %19 : f32 to vector<32x128xf32>
    %38 = arith.mulf %37, %10 : vector<32x128xf32>
    %39 = arith.addf %36, %38 : vector<32x128xf32>
    %40 = vector.broadcast %20 : f32 to vector<32x128xf32>
    %41 = arith.addf %39, %40 : vector<32x128xf32>
    %42 = arith.minimumf %27, %34 : vector<32x128xf32>
    %43 = arith.minimumf %42, %41 : vector<32x128xf32>
    %44 = arith.maximumf %11, %43 : vector<32x128xf32>
    %c9 = arith.constant 9 : index
    %45 = memref.load %arg0[%c9] : memref<108xf32, #tpu.memory_space<smem>>
    %c10 = arith.constant 10 : index
    %46 = memref.load %arg0[%c10] : memref<108xf32, #tpu.memory_space<smem>>
    %c11 = arith.constant 11 : index
    %47 = memref.load %arg0[%c11] : memref<108xf32, #tpu.memory_space<smem>>
    %c12 = arith.constant 12 : index
    %48 = memref.load %arg0[%c12] : memref<108xf32, #tpu.memory_space<smem>>
    %c13 = arith.constant 13 : index
    %49 = memref.load %arg0[%c13] : memref<108xf32, #tpu.memory_space<smem>>
    %c14 = arith.constant 14 : index
    %50 = memref.load %arg0[%c14] : memref<108xf32, #tpu.memory_space<smem>>
    %c15 = arith.constant 15 : index
    %51 = memref.load %arg0[%c15] : memref<108xf32, #tpu.memory_space<smem>>
    %c16 = arith.constant 16 : index
    %52 = memref.load %arg0[%c16] : memref<108xf32, #tpu.memory_space<smem>>
    %c17 = arith.constant 17 : index
    %53 = memref.load %arg0[%c17] : memref<108xf32, #tpu.memory_space<smem>>
    %54 = vector.broadcast %45 : f32 to vector<32x128xf32>
    %55 = arith.mulf %54, %7 : vector<32x128xf32>
    %56 = vector.broadcast %46 : f32 to vector<32x128xf32>
    %57 = arith.mulf %56, %10 : vector<32x128xf32>
    %58 = arith.addf %55, %57 : vector<32x128xf32>
    %59 = vector.broadcast %47 : f32 to vector<32x128xf32>
    %60 = arith.addf %58, %59 : vector<32x128xf32>
    %61 = vector.broadcast %48 : f32 to vector<32x128xf32>
    %62 = arith.mulf %61, %7 : vector<32x128xf32>
    %63 = vector.broadcast %49 : f32 to vector<32x128xf32>
    %64 = arith.mulf %63, %10 : vector<32x128xf32>
    %65 = arith.addf %62, %64 : vector<32x128xf32>
    %66 = vector.broadcast %50 : f32 to vector<32x128xf32>
    %67 = arith.addf %65, %66 : vector<32x128xf32>
    %68 = vector.broadcast %51 : f32 to vector<32x128xf32>
    %69 = arith.mulf %68, %7 : vector<32x128xf32>
    %70 = vector.broadcast %52 : f32 to vector<32x128xf32>
    %71 = arith.mulf %70, %10 : vector<32x128xf32>
    %72 = arith.addf %69, %71 : vector<32x128xf32>
    %73 = vector.broadcast %53 : f32 to vector<32x128xf32>
    %74 = arith.addf %72, %73 : vector<32x128xf32>
    %75 = arith.minimumf %60, %67 : vector<32x128xf32>
    %76 = arith.minimumf %75, %74 : vector<32x128xf32>
    %77 = arith.maximumf %44, %76 : vector<32x128xf32>
    %c18 = arith.constant 18 : index
    %78 = memref.load %arg0[%c18] : memref<108xf32, #tpu.memory_space<smem>>
    %c19 = arith.constant 19 : index
    %79 = memref.load %arg0[%c19] : memref<108xf32, #tpu.memory_space<smem>>
    %c20 = arith.constant 20 : index
    %80 = memref.load %arg0[%c20] : memref<108xf32, #tpu.memory_space<smem>>
    %c21 = arith.constant 21 : index
    %81 = memref.load %arg0[%c21] : memref<108xf32, #tpu.memory_space<smem>>
    %c22 = arith.constant 22 : index
    %82 = memref.load %arg0[%c22] : memref<108xf32, #tpu.memory_space<smem>>
    %c23 = arith.constant 23 : index
    %83 = memref.load %arg0[%c23] : memref<108xf32, #tpu.memory_space<smem>>
    %c24 = arith.constant 24 : index
    %84 = memref.load %arg0[%c24] : memref<108xf32, #tpu.memory_space<smem>>
    %c25 = arith.constant 25 : index
    %85 = memref.load %arg0[%c25] : memref<108xf32, #tpu.memory_space<smem>>
    %c26 = arith.constant 26 : index
    %86 = memref.load %arg0[%c26] : memref<108xf32, #tpu.memory_space<smem>>
    %87 = vector.broadcast %78 : f32 to vector<32x128xf32>
    %88 = arith.mulf %87, %7 : vector<32x128xf32>
    %89 = vector.broadcast %79 : f32 to vector<32x128xf32>
    %90 = arith.mulf %89, %10 : vector<32x128xf32>
    %91 = arith.addf %88, %90 : vector<32x128xf32>
    %92 = vector.broadcast %80 : f32 to vector<32x128xf32>
    %93 = arith.addf %91, %92 : vector<32x128xf32>
    %94 = vector.broadcast %81 : f32 to vector<32x128xf32>
    %95 = arith.mulf %94, %7 : vector<32x128xf32>
    %96 = vector.broadcast %82 : f32 to vector<32x128xf32>
    %97 = arith.mulf %96, %10 : vector<32x128xf32>
    %98 = arith.addf %95, %97 : vector<32x128xf32>
    %99 = vector.broadcast %83 : f32 to vector<32x128xf32>
    %100 = arith.addf %98, %99 : vector<32x128xf32>
    %101 = vector.broadcast %84 : f32 to vector<32x128xf32>
    %102 = arith.mulf %101, %7 : vector<32x128xf32>
    %103 = vector.broadcast %85 : f32 to vector<32x128xf32>
    %104 = arith.mulf %103, %10 : vector<32x128xf32>
    %105 = arith.addf %102, %104 : vector<32x128xf32>
    %106 = vector.broadcast %86 : f32 to vector<32x128xf32>
    %107 = arith.addf %105, %106 : vector<32x128xf32>
    %108 = arith.minimumf %93, %100 : vector<32x128xf32>
    %109 = arith.minimumf %108, %107 : vector<32x128xf32>
    %110 = arith.maximumf %77, %109 : vector<32x128xf32>
    %c27 = arith.constant 27 : index
    %111 = memref.load %arg0[%c27] : memref<108xf32, #tpu.memory_space<smem>>
    %c28 = arith.constant 28 : index
    %112 = memref.load %arg0[%c28] : memref<108xf32, #tpu.memory_space<smem>>
    %c29 = arith.constant 29 : index
    %113 = memref.load %arg0[%c29] : memref<108xf32, #tpu.memory_space<smem>>
    %c30 = arith.constant 30 : index
    %114 = memref.load %arg0[%c30] : memref<108xf32, #tpu.memory_space<smem>>
    %c31 = arith.constant 31 : index
    %115 = memref.load %arg0[%c31] : memref<108xf32, #tpu.memory_space<smem>>
    %c32 = arith.constant 32 : index
    %116 = memref.load %arg0[%c32] : memref<108xf32, #tpu.memory_space<smem>>
    %c33 = arith.constant 33 : index
    %117 = memref.load %arg0[%c33] : memref<108xf32, #tpu.memory_space<smem>>
    %c34 = arith.constant 34 : index
    %118 = memref.load %arg0[%c34] : memref<108xf32, #tpu.memory_space<smem>>
    %c35 = arith.constant 35 : index
    %119 = memref.load %arg0[%c35] : memref<108xf32, #tpu.memory_space<smem>>
    %120 = vector.broadcast %111 : f32 to vector<32x128xf32>
    %121 = arith.mulf %120, %7 : vector<32x128xf32>
    %122 = vector.broadcast %112 : f32 to vector<32x128xf32>
    %123 = arith.mulf %122, %10 : vector<32x128xf32>
    %124 = arith.addf %121, %123 : vector<32x128xf32>
    %125 = vector.broadcast %113 : f32 to vector<32x128xf32>
    %126 = arith.addf %124, %125 : vector<32x128xf32>
    %127 = vector.broadcast %114 : f32 to vector<32x128xf32>
    %128 = arith.mulf %127, %7 : vector<32x128xf32>
    %129 = vector.broadcast %115 : f32 to vector<32x128xf32>
    %130 = arith.mulf %129, %10 : vector<32x128xf32>
    %131 = arith.addf %128, %130 : vector<32x128xf32>
    %132 = vector.broadcast %116 : f32 to vector<32x128xf32>
    %133 = arith.addf %131, %132 : vector<32x128xf32>
    %134 = vector.broadcast %117 : f32 to vector<32x128xf32>
    %135 = arith.mulf %134, %7 : vector<32x128xf32>
    %136 = vector.broadcast %118 : f32 to vector<32x128xf32>
    %137 = arith.mulf %136, %10 : vector<32x128xf32>
    %138 = arith.addf %135, %137 : vector<32x128xf32>
    %139 = vector.broadcast %119 : f32 to vector<32x128xf32>
    %140 = arith.addf %138, %139 : vector<32x128xf32>
    %141 = arith.minimumf %126, %133 : vector<32x128xf32>
    %142 = arith.minimumf %141, %140 : vector<32x128xf32>
    %143 = arith.maximumf %110, %142 : vector<32x128xf32>
    %c36 = arith.constant 36 : index
    %144 = memref.load %arg0[%c36] : memref<108xf32, #tpu.memory_space<smem>>
    %c37 = arith.constant 37 : index
    %145 = memref.load %arg0[%c37] : memref<108xf32, #tpu.memory_space<smem>>
    %c38 = arith.constant 38 : index
    %146 = memref.load %arg0[%c38] : memref<108xf32, #tpu.memory_space<smem>>
    %c39 = arith.constant 39 : index
    %147 = memref.load %arg0[%c39] : memref<108xf32, #tpu.memory_space<smem>>
    %c40 = arith.constant 40 : index
    %148 = memref.load %arg0[%c40] : memref<108xf32, #tpu.memory_space<smem>>
    %c41 = arith.constant 41 : index
    %149 = memref.load %arg0[%c41] : memref<108xf32, #tpu.memory_space<smem>>
    %c42 = arith.constant 42 : index
    %150 = memref.load %arg0[%c42] : memref<108xf32, #tpu.memory_space<smem>>
    %c43 = arith.constant 43 : index
    %151 = memref.load %arg0[%c43] : memref<108xf32, #tpu.memory_space<smem>>
    %c44 = arith.constant 44 : index
    %152 = memref.load %arg0[%c44] : memref<108xf32, #tpu.memory_space<smem>>
    %153 = vector.broadcast %144 : f32 to vector<32x128xf32>
    %154 = arith.mulf %153, %7 : vector<32x128xf32>
    %155 = vector.broadcast %145 : f32 to vector<32x128xf32>
    %156 = arith.mulf %155, %10 : vector<32x128xf32>
    %157 = arith.addf %154, %156 : vector<32x128xf32>
    %158 = vector.broadcast %146 : f32 to vector<32x128xf32>
    %159 = arith.addf %157, %158 : vector<32x128xf32>
    %160 = vector.broadcast %147 : f32 to vector<32x128xf32>
    %161 = arith.mulf %160, %7 : vector<32x128xf32>
    %162 = vector.broadcast %148 : f32 to vector<32x128xf32>
    %163 = arith.mulf %162, %10 : vector<32x128xf32>
    %164 = arith.addf %161, %163 : vector<32x128xf32>
    %165 = vector.broadcast %149 : f32 to vector<32x128xf32>
    %166 = arith.addf %164, %165 : vector<32x128xf32>
    %167 = vector.broadcast %150 : f32 to vector<32x128xf32>
    %168 = arith.mulf %167, %7 : vector<32x128xf32>
    %169 = vector.broadcast %151 : f32 to vector<32x128xf32>
    %170 = arith.mulf %169, %10 : vector<32x128xf32>
    %171 = arith.addf %168, %170 : vector<32x128xf32>
    %172 = vector.broadcast %152 : f32 to vector<32x128xf32>
    %173 = arith.addf %171, %172 : vector<32x128xf32>
    %174 = arith.minimumf %159, %166 : vector<32x128xf32>
    %175 = arith.minimumf %174, %173 : vector<32x128xf32>
    %176 = arith.maximumf %143, %175 : vector<32x128xf32>
    %c45 = arith.constant 45 : index
    %177 = memref.load %arg0[%c45] : memref<108xf32, #tpu.memory_space<smem>>
    %c46 = arith.constant 46 : index
    %178 = memref.load %arg0[%c46] : memref<108xf32, #tpu.memory_space<smem>>
    %c47 = arith.constant 47 : index
    %179 = memref.load %arg0[%c47] : memref<108xf32, #tpu.memory_space<smem>>
    %c48 = arith.constant 48 : index
    %180 = memref.load %arg0[%c48] : memref<108xf32, #tpu.memory_space<smem>>
    %c49 = arith.constant 49 : index
    %181 = memref.load %arg0[%c49] : memref<108xf32, #tpu.memory_space<smem>>
    %c50 = arith.constant 50 : index
    %182 = memref.load %arg0[%c50] : memref<108xf32, #tpu.memory_space<smem>>
    %c51 = arith.constant 51 : index
    %183 = memref.load %arg0[%c51] : memref<108xf32, #tpu.memory_space<smem>>
    %c52 = arith.constant 52 : index
    %184 = memref.load %arg0[%c52] : memref<108xf32, #tpu.memory_space<smem>>
    %c53 = arith.constant 53 : index
    %185 = memref.load %arg0[%c53] : memref<108xf32, #tpu.memory_space<smem>>
    %186 = vector.broadcast %177 : f32 to vector<32x128xf32>
    %187 = arith.mulf %186, %7 : vector<32x128xf32>
    %188 = vector.broadcast %178 : f32 to vector<32x128xf32>
    %189 = arith.mulf %188, %10 : vector<32x128xf32>
    %190 = arith.addf %187, %189 : vector<32x128xf32>
    %191 = vector.broadcast %179 : f32 to vector<32x128xf32>
    %192 = arith.addf %190, %191 : vector<32x128xf32>
    %193 = vector.broadcast %180 : f32 to vector<32x128xf32>
    %194 = arith.mulf %193, %7 : vector<32x128xf32>
    %195 = vector.broadcast %181 : f32 to vector<32x128xf32>
    %196 = arith.mulf %195, %10 : vector<32x128xf32>
    %197 = arith.addf %194, %196 : vector<32x128xf32>
    %198 = vector.broadcast %182 : f32 to vector<32x128xf32>
    %199 = arith.addf %197, %198 : vector<32x128xf32>
    %200 = vector.broadcast %183 : f32 to vector<32x128xf32>
    %201 = arith.mulf %200, %7 : vector<32x128xf32>
    %202 = vector.broadcast %184 : f32 to vector<32x128xf32>
    %203 = arith.mulf %202, %10 : vector<32x128xf32>
    %204 = arith.addf %201, %203 : vector<32x128xf32>
    %205 = vector.broadcast %185 : f32 to vector<32x128xf32>
    %206 = arith.addf %204, %205 : vector<32x128xf32>
    %207 = arith.minimumf %192, %199 : vector<32x128xf32>
    %208 = arith.minimumf %207, %206 : vector<32x128xf32>
    %209 = arith.maximumf %176, %208 : vector<32x128xf32>
    %c54 = arith.constant 54 : index
    %210 = memref.load %arg0[%c54] : memref<108xf32, #tpu.memory_space<smem>>
    %c55 = arith.constant 55 : index
    %211 = memref.load %arg0[%c55] : memref<108xf32, #tpu.memory_space<smem>>
    %c56 = arith.constant 56 : index
    %212 = memref.load %arg0[%c56] : memref<108xf32, #tpu.memory_space<smem>>
    %c57 = arith.constant 57 : index
    %213 = memref.load %arg0[%c57] : memref<108xf32, #tpu.memory_space<smem>>
    %c58 = arith.constant 58 : index
    %214 = memref.load %arg0[%c58] : memref<108xf32, #tpu.memory_space<smem>>
    %c59 = arith.constant 59 : index
    %215 = memref.load %arg0[%c59] : memref<108xf32, #tpu.memory_space<smem>>
    %c60 = arith.constant 60 : index
    %216 = memref.load %arg0[%c60] : memref<108xf32, #tpu.memory_space<smem>>
    %c61 = arith.constant 61 : index
    %217 = memref.load %arg0[%c61] : memref<108xf32, #tpu.memory_space<smem>>
    %c62 = arith.constant 62 : index
    %218 = memref.load %arg0[%c62] : memref<108xf32, #tpu.memory_space<smem>>
    %219 = vector.broadcast %210 : f32 to vector<32x128xf32>
    %220 = arith.mulf %219, %7 : vector<32x128xf32>
    %221 = vector.broadcast %211 : f32 to vector<32x128xf32>
    %222 = arith.mulf %221, %10 : vector<32x128xf32>
    %223 = arith.addf %220, %222 : vector<32x128xf32>
    %224 = vector.broadcast %212 : f32 to vector<32x128xf32>
    %225 = arith.addf %223, %224 : vector<32x128xf32>
    %226 = vector.broadcast %213 : f32 to vector<32x128xf32>
    %227 = arith.mulf %226, %7 : vector<32x128xf32>
    %228 = vector.broadcast %214 : f32 to vector<32x128xf32>
    %229 = arith.mulf %228, %10 : vector<32x128xf32>
    %230 = arith.addf %227, %229 : vector<32x128xf32>
    %231 = vector.broadcast %215 : f32 to vector<32x128xf32>
    %232 = arith.addf %230, %231 : vector<32x128xf32>
    %233 = vector.broadcast %216 : f32 to vector<32x128xf32>
    %234 = arith.mulf %233, %7 : vector<32x128xf32>
    %235 = vector.broadcast %217 : f32 to vector<32x128xf32>
    %236 = arith.mulf %235, %10 : vector<32x128xf32>
    %237 = arith.addf %234, %236 : vector<32x128xf32>
    %238 = vector.broadcast %218 : f32 to vector<32x128xf32>
    %239 = arith.addf %237, %238 : vector<32x128xf32>
    %240 = arith.minimumf %225, %232 : vector<32x128xf32>
    %241 = arith.minimumf %240, %239 : vector<32x128xf32>
    %242 = arith.maximumf %209, %241 : vector<32x128xf32>
    %c63 = arith.constant 63 : index
    %243 = memref.load %arg0[%c63] : memref<108xf32, #tpu.memory_space<smem>>
    %c64 = arith.constant 64 : index
    %244 = memref.load %arg0[%c64] : memref<108xf32, #tpu.memory_space<smem>>
    %c65 = arith.constant 65 : index
    %245 = memref.load %arg0[%c65] : memref<108xf32, #tpu.memory_space<smem>>
    %c66 = arith.constant 66 : index
    %246 = memref.load %arg0[%c66] : memref<108xf32, #tpu.memory_space<smem>>
    %c67 = arith.constant 67 : index
    %247 = memref.load %arg0[%c67] : memref<108xf32, #tpu.memory_space<smem>>
    %c68 = arith.constant 68 : index
    %248 = memref.load %arg0[%c68] : memref<108xf32, #tpu.memory_space<smem>>
    %c69 = arith.constant 69 : index
    %249 = memref.load %arg0[%c69] : memref<108xf32, #tpu.memory_space<smem>>
    %c70 = arith.constant 70 : index
    %250 = memref.load %arg0[%c70] : memref<108xf32, #tpu.memory_space<smem>>
    %c71 = arith.constant 71 : index
    %251 = memref.load %arg0[%c71] : memref<108xf32, #tpu.memory_space<smem>>
    %252 = vector.broadcast %243 : f32 to vector<32x128xf32>
    %253 = arith.mulf %252, %7 : vector<32x128xf32>
    %254 = vector.broadcast %244 : f32 to vector<32x128xf32>
    %255 = arith.mulf %254, %10 : vector<32x128xf32>
    %256 = arith.addf %253, %255 : vector<32x128xf32>
    %257 = vector.broadcast %245 : f32 to vector<32x128xf32>
    %258 = arith.addf %256, %257 : vector<32x128xf32>
    %259 = vector.broadcast %246 : f32 to vector<32x128xf32>
    %260 = arith.mulf %259, %7 : vector<32x128xf32>
    %261 = vector.broadcast %247 : f32 to vector<32x128xf32>
    %262 = arith.mulf %261, %10 : vector<32x128xf32>
    %263 = arith.addf %260, %262 : vector<32x128xf32>
    %264 = vector.broadcast %248 : f32 to vector<32x128xf32>
    %265 = arith.addf %263, %264 : vector<32x128xf32>
    %266 = vector.broadcast %249 : f32 to vector<32x128xf32>
    %267 = arith.mulf %266, %7 : vector<32x128xf32>
    %268 = vector.broadcast %250 : f32 to vector<32x128xf32>
    %269 = arith.mulf %268, %10 : vector<32x128xf32>
    %270 = arith.addf %267, %269 : vector<32x128xf32>
    %271 = vector.broadcast %251 : f32 to vector<32x128xf32>
    %272 = arith.addf %270, %271 : vector<32x128xf32>
    %273 = arith.minimumf %258, %265 : vector<32x128xf32>
    %274 = arith.minimumf %273, %272 : vector<32x128xf32>
    %275 = arith.maximumf %242, %274 : vector<32x128xf32>
    %c72 = arith.constant 72 : index
    %276 = memref.load %arg0[%c72] : memref<108xf32, #tpu.memory_space<smem>>
    %c73 = arith.constant 73 : index
    %277 = memref.load %arg0[%c73] : memref<108xf32, #tpu.memory_space<smem>>
    %c74 = arith.constant 74 : index
    %278 = memref.load %arg0[%c74] : memref<108xf32, #tpu.memory_space<smem>>
    %c75 = arith.constant 75 : index
    %279 = memref.load %arg0[%c75] : memref<108xf32, #tpu.memory_space<smem>>
    %c76 = arith.constant 76 : index
    %280 = memref.load %arg0[%c76] : memref<108xf32, #tpu.memory_space<smem>>
    %c77 = arith.constant 77 : index
    %281 = memref.load %arg0[%c77] : memref<108xf32, #tpu.memory_space<smem>>
    %c78 = arith.constant 78 : index
    %282 = memref.load %arg0[%c78] : memref<108xf32, #tpu.memory_space<smem>>
    %c79 = arith.constant 79 : index
    %283 = memref.load %arg0[%c79] : memref<108xf32, #tpu.memory_space<smem>>
    %c80 = arith.constant 80 : index
    %284 = memref.load %arg0[%c80] : memref<108xf32, #tpu.memory_space<smem>>
    %285 = vector.broadcast %276 : f32 to vector<32x128xf32>
    %286 = arith.mulf %285, %7 : vector<32x128xf32>
    %287 = vector.broadcast %277 : f32 to vector<32x128xf32>
    %288 = arith.mulf %287, %10 : vector<32x128xf32>
    %289 = arith.addf %286, %288 : vector<32x128xf32>
    %290 = vector.broadcast %278 : f32 to vector<32x128xf32>
    %291 = arith.addf %289, %290 : vector<32x128xf32>
    %292 = vector.broadcast %279 : f32 to vector<32x128xf32>
    %293 = arith.mulf %292, %7 : vector<32x128xf32>
    %294 = vector.broadcast %280 : f32 to vector<32x128xf32>
    %295 = arith.mulf %294, %10 : vector<32x128xf32>
    %296 = arith.addf %293, %295 : vector<32x128xf32>
    %297 = vector.broadcast %281 : f32 to vector<32x128xf32>
    %298 = arith.addf %296, %297 : vector<32x128xf32>
    %299 = vector.broadcast %282 : f32 to vector<32x128xf32>
    %300 = arith.mulf %299, %7 : vector<32x128xf32>
    %301 = vector.broadcast %283 : f32 to vector<32x128xf32>
    %302 = arith.mulf %301, %10 : vector<32x128xf32>
    %303 = arith.addf %300, %302 : vector<32x128xf32>
    %304 = vector.broadcast %284 : f32 to vector<32x128xf32>
    %305 = arith.addf %303, %304 : vector<32x128xf32>
    %306 = arith.minimumf %291, %298 : vector<32x128xf32>
    %307 = arith.minimumf %306, %305 : vector<32x128xf32>
    %308 = arith.maximumf %275, %307 : vector<32x128xf32>
    %c81 = arith.constant 81 : index
    %309 = memref.load %arg0[%c81] : memref<108xf32, #tpu.memory_space<smem>>
    %c82 = arith.constant 82 : index
    %310 = memref.load %arg0[%c82] : memref<108xf32, #tpu.memory_space<smem>>
    %c83 = arith.constant 83 : index
    %311 = memref.load %arg0[%c83] : memref<108xf32, #tpu.memory_space<smem>>
    %c84 = arith.constant 84 : index
    %312 = memref.load %arg0[%c84] : memref<108xf32, #tpu.memory_space<smem>>
    %c85 = arith.constant 85 : index
    %313 = memref.load %arg0[%c85] : memref<108xf32, #tpu.memory_space<smem>>
    %c86 = arith.constant 86 : index
    %314 = memref.load %arg0[%c86] : memref<108xf32, #tpu.memory_space<smem>>
    %c87 = arith.constant 87 : index
    %315 = memref.load %arg0[%c87] : memref<108xf32, #tpu.memory_space<smem>>
    %c88 = arith.constant 88 : index
    %316 = memref.load %arg0[%c88] : memref<108xf32, #tpu.memory_space<smem>>
    %c89 = arith.constant 89 : index
    %317 = memref.load %arg0[%c89] : memref<108xf32, #tpu.memory_space<smem>>
    %318 = vector.broadcast %309 : f32 to vector<32x128xf32>
    %319 = arith.mulf %318, %7 : vector<32x128xf32>
    %320 = vector.broadcast %310 : f32 to vector<32x128xf32>
    %321 = arith.mulf %320, %10 : vector<32x128xf32>
    %322 = arith.addf %319, %321 : vector<32x128xf32>
    %323 = vector.broadcast %311 : f32 to vector<32x128xf32>
    %324 = arith.addf %322, %323 : vector<32x128xf32>
    %325 = vector.broadcast %312 : f32 to vector<32x128xf32>
    %326 = arith.mulf %325, %7 : vector<32x128xf32>
    %327 = vector.broadcast %313 : f32 to vector<32x128xf32>
    %328 = arith.mulf %327, %10 : vector<32x128xf32>
    %329 = arith.addf %326, %328 : vector<32x128xf32>
    %330 = vector.broadcast %314 : f32 to vector<32x128xf32>
    %331 = arith.addf %329, %330 : vector<32x128xf32>
    %332 = vector.broadcast %315 : f32 to vector<32x128xf32>
    %333 = arith.mulf %332, %7 : vector<32x128xf32>
    %334 = vector.broadcast %316 : f32 to vector<32x128xf32>
    %335 = arith.mulf %334, %10 : vector<32x128xf32>
    %336 = arith.addf %333, %335 : vector<32x128xf32>
    %337 = vector.broadcast %317 : f32 to vector<32x128xf32>
    %338 = arith.addf %336, %337 : vector<32x128xf32>
    %339 = arith.minimumf %324, %331 : vector<32x128xf32>
    %340 = arith.minimumf %339, %338 : vector<32x128xf32>
    %341 = arith.maximumf %308, %340 : vector<32x128xf32>
    %c90 = arith.constant 90 : index
    %342 = memref.load %arg0[%c90] : memref<108xf32, #tpu.memory_space<smem>>
    %c91 = arith.constant 91 : index
    %343 = memref.load %arg0[%c91] : memref<108xf32, #tpu.memory_space<smem>>
    %c92 = arith.constant 92 : index
    %344 = memref.load %arg0[%c92] : memref<108xf32, #tpu.memory_space<smem>>
    %c93 = arith.constant 93 : index
    %345 = memref.load %arg0[%c93] : memref<108xf32, #tpu.memory_space<smem>>
    %c94 = arith.constant 94 : index
    %346 = memref.load %arg0[%c94] : memref<108xf32, #tpu.memory_space<smem>>
    %c95 = arith.constant 95 : index
    %347 = memref.load %arg0[%c95] : memref<108xf32, #tpu.memory_space<smem>>
    %c96 = arith.constant 96 : index
    %348 = memref.load %arg0[%c96] : memref<108xf32, #tpu.memory_space<smem>>
    %c97 = arith.constant 97 : index
    %349 = memref.load %arg0[%c97] : memref<108xf32, #tpu.memory_space<smem>>
    %c98 = arith.constant 98 : index
    %350 = memref.load %arg0[%c98] : memref<108xf32, #tpu.memory_space<smem>>
    %351 = vector.broadcast %342 : f32 to vector<32x128xf32>
    %352 = arith.mulf %351, %7 : vector<32x128xf32>
    %353 = vector.broadcast %343 : f32 to vector<32x128xf32>
    %354 = arith.mulf %353, %10 : vector<32x128xf32>
    %355 = arith.addf %352, %354 : vector<32x128xf32>
    %356 = vector.broadcast %344 : f32 to vector<32x128xf32>
    %357 = arith.addf %355, %356 : vector<32x128xf32>
    %358 = vector.broadcast %345 : f32 to vector<32x128xf32>
    %359 = arith.mulf %358, %7 : vector<32x128xf32>
    %360 = vector.broadcast %346 : f32 to vector<32x128xf32>
    %361 = arith.mulf %360, %10 : vector<32x128xf32>
    %362 = arith.addf %359, %361 : vector<32x128xf32>
    %363 = vector.broadcast %347 : f32 to vector<32x128xf32>
    %364 = arith.addf %362, %363 : vector<32x128xf32>
    %365 = vector.broadcast %348 : f32 to vector<32x128xf32>
    %366 = arith.mulf %365, %7 : vector<32x128xf32>
    %367 = vector.broadcast %349 : f32 to vector<32x128xf32>
    %368 = arith.mulf %367, %10 : vector<32x128xf32>
    %369 = arith.addf %366, %368 : vector<32x128xf32>
    %370 = vector.broadcast %350 : f32 to vector<32x128xf32>
    %371 = arith.addf %369, %370 : vector<32x128xf32>
    %372 = arith.minimumf %357, %364 : vector<32x128xf32>
    %373 = arith.minimumf %372, %371 : vector<32x128xf32>
    %374 = arith.maximumf %341, %373 : vector<32x128xf32>
    %c99 = arith.constant 99 : index
    %375 = memref.load %arg0[%c99] : memref<108xf32, #tpu.memory_space<smem>>
    %c100 = arith.constant 100 : index
    %376 = memref.load %arg0[%c100] : memref<108xf32, #tpu.memory_space<smem>>
    %c101 = arith.constant 101 : index
    %377 = memref.load %arg0[%c101] : memref<108xf32, #tpu.memory_space<smem>>
    %c102 = arith.constant 102 : index
    %378 = memref.load %arg0[%c102] : memref<108xf32, #tpu.memory_space<smem>>
    %c103 = arith.constant 103 : index
    %379 = memref.load %arg0[%c103] : memref<108xf32, #tpu.memory_space<smem>>
    %c104 = arith.constant 104 : index
    %380 = memref.load %arg0[%c104] : memref<108xf32, #tpu.memory_space<smem>>
    %c105 = arith.constant 105 : index
    %381 = memref.load %arg0[%c105] : memref<108xf32, #tpu.memory_space<smem>>
    %c106 = arith.constant 106 : index
    %382 = memref.load %arg0[%c106] : memref<108xf32, #tpu.memory_space<smem>>
    %c107 = arith.constant 107 : index
    %383 = memref.load %arg0[%c107] : memref<108xf32, #tpu.memory_space<smem>>
    %384 = vector.broadcast %375 : f32 to vector<32x128xf32>
    %385 = arith.mulf %384, %7 : vector<32x128xf32>
    %386 = vector.broadcast %376 : f32 to vector<32x128xf32>
    %387 = arith.mulf %386, %10 : vector<32x128xf32>
    %388 = arith.addf %385, %387 : vector<32x128xf32>
    %389 = vector.broadcast %377 : f32 to vector<32x128xf32>
    %390 = arith.addf %388, %389 : vector<32x128xf32>
    %391 = vector.broadcast %378 : f32 to vector<32x128xf32>
    %392 = arith.mulf %391, %7 : vector<32x128xf32>
    %393 = vector.broadcast %379 : f32 to vector<32x128xf32>
    %394 = arith.mulf %393, %10 : vector<32x128xf32>
    %395 = arith.addf %392, %394 : vector<32x128xf32>
    %396 = vector.broadcast %380 : f32 to vector<32x128xf32>
    %397 = arith.addf %395, %396 : vector<32x128xf32>
    %398 = vector.broadcast %381 : f32 to vector<32x128xf32>
    %399 = arith.mulf %398, %7 : vector<32x128xf32>
    %400 = vector.broadcast %382 : f32 to vector<32x128xf32>
    %401 = arith.mulf %400, %10 : vector<32x128xf32>
    %402 = arith.addf %399, %401 : vector<32x128xf32>
    %403 = vector.broadcast %383 : f32 to vector<32x128xf32>
    %404 = arith.addf %402, %403 : vector<32x128xf32>
    %405 = arith.minimumf %390, %397 : vector<32x128xf32>
    %406 = arith.minimumf %405, %404 : vector<32x128xf32>
    %407 = arith.maximumf %374, %406 : vector<32x128xf32>
    %cst_0 = arith.constant 0.000000e+00 : f32
    %408 = vector.broadcast %cst_0 : f32 to vector<32x128xf32>
    %409 = arith.cmpf oge, %407, %408 : vector<32x128xf32>
    %410 = arith.extui %409 : vector<32x128xi1> to vector<32x128xi32>
    %411 = arith.sitofp %410 : vector<32x128xi32> to vector<32x128xf32>
    %c0_1 = arith.constant 0 : index
    %c0_2 = arith.constant 0 : index
    %412 = vector.load %arg2[%c0_1, %c0_2] : memref<32x128xf32, #tpu.memory_space<vmem>>, vector<32x128xf32>
    tpu.vector_store %arg2[%c0_1, %c0_2], %411 {strides = array<i32>} : memref<32x128xf32, #tpu.memory_space<vmem>>, vector<32x128xf32>,
    %c0_3 = arith.constant 0 : index
    %c0_4 = arith.constant 0 : index
    %413 = vector.load %arg1[%c0_3, %c0_4] : memref<32x128xf32, #tpu.memory_space<vmem>>, vector<32x128xf32>
    %414 = arith.subf %411, %413 : vector<32x128xf32>
    %415 = arith.mulf %414, %414 : vector<32x128xf32>
    %416 = vector.shape_cast %415 : vector<32x128xf32> to vector<1x32x128xf32>
    %cst_5 = arith.constant dense<0.000000e+00> : vector<1xf32>
    %417 = vector.multi_reduction <add>, %416, %cst_5 [1, 2] : vector<1x32x128xf32> to vector<1xf32>
    %418 = vector.shape_cast %417 : vector<1xf32> to vector<1x1x1xf32>
    %419 = vector.extract %418[0, 0, 0] : f32 from vector<1x1x1xf32>
    %c0_6 = arith.constant 0 : index
    %420 = memref.load %arg3[%c0_6] : memref<1xf32, #tpu.memory_space<smem>>
    memref.store %419, %arg3[%c0_6] : memref<1xf32, #tpu.memory_space<smem>>
    return
  }
}

</mosaic_0001>

<llo_original>
// kernel: forward.1
$region0: #{forward.1}
  #allocation0 [shape = 'u32[]', space=smem, size = 0x4, offset = 0x4, fixed_abs, tag = 'smem constant byte address 0x4 - core index']
  #allocation1 [shape = 'u32[144,128]{1,0:T(1,128)}', space=vmem, size = 0x12000, scoped, tag = 'internal scratch']
  %s0 = inlined_call_operand.vmem [shape: f32[108], index: 0, kind: input, shape index: {}]
  %s1 = inlined_call_operand.vmem [shape: f32[32,128], index: 1, kind: input, shape index: {}]
  %s2 = inlined_call_operand.vmem [shape: f32[32,128], index: 2, kind: output, shape index: {0}]
  %s3 = inlined_call_operand.hbm [shape: f32[1], index: 3, kind: output, shape index: {1}]
  %4 = xla_tuple %s2, %s3
  %s5 = sld [smem:[#allocation0]]
  $region30: #{forward.1} parent=0
    _
  %s7 = ssub.s32 1, %s5
  %s8 = scalar_select 0, %s7, %s5
  $region1: #{forward.1} parent=0
    #allocation2 [shape = 'u8[512]{0}', space=smem, size = 0x200, scoped, tag = 'input window, operand 0, single buffered']
    #allocation3 [shape = 's32[1]{0}', space=sflag, size = 0x4, scoped, tag = 'scoped memory for forward.1']
    #allocation4 [shape = 's32[1]{0}', space=sflag, size = 0x4, scoped, tag = 'scoped memory for forward.1']
    #allocation5 [shape = 'u8[512]{0}', space=smem, size = 0x200, scoped, tag = 'output window, operand 1, single buffered']
    %9 = vsyncpa [#allocation4], 0
    %10 = vsyncpa [#allocation3], 0
    // Predicated region
    $region2: #{forward.1} parent=1 // pred_check
      _
    $region3: #{forward.1} parent=1 // pred_check_branch
      %12 = sbr.rel (0) target = $region5
    $region4: #{forward.1} parent=1 // pred_region
      %s14 = ssub.s32 16, 16
      %15 = vsyncadd [#allocation4], %s14
      %s17 = sshll.u32 %s0, 4
      %s18 = int_to_ptr.vmem [resolvable:$true] %s17
      %20 = dma.vmem_to_smem %s18, 16, [#allocation2], [#allocation4]
    $region5: #{forward.1} parent=1 // pred_fallthru
      _
    // Predicated region
    $region6: #{forward.1} parent=1 // pred_check
      _
    $region7: #{forward.1} parent=1 // pred_check_branch
      %22 = sbr.rel (0) target = $region9
    $region8: #{forward.1} parent=1 // pred_region
      _
    $region9: #{forward.1} parent=1 // pred_fallthru
      _
    // Predicated region
    $region10: #{forward.1} parent=1 // pred_check
      _
    $region11: #{forward.1} parent=1 // pred_check_branch
      %24 = sbr.rel (0) target = $region13
    $region12: #{forward.1} parent=1 // pred_region
      %25 = dma.done [#allocation4], 16
    $region13: #{forward.1} parent=1 // pred_fallthru
      _
    %26 = sfence
    %v27 = vlaneseq
    %v28 = vshrl.u32 %v27, 7
    %v29 = vadd.s32 %v28, 8
    %v30 = vadd.s32 %v28, 16
    %v31 = vadd.s32 %v28, 24
    %v32 = vlaneseq
    %v33 = vand.u32 %v32, 127
    %v34 = vmul.u32 %v28, 2
    %v35 = vmul.u32 %v29, 2
    %v36 = vmul.u32 %v30, 2
    %v37 = vmul.u32 %v31, 2
    %v38 = vshra.s32 %v33, 6
    %v39 = vadd.s32 %v34, %v38
    %v40 = vadd.s32 %v35, %v38
    %v41 = vadd.s32 %v36, %v38
    %v42 = vadd.s32 %v37, %v38
    %v43 = vcvt.s32.f32 %v39
    %v44 = vcvt.s32.f32 %v40
    %v45 = vcvt.s32.f32 %v41
    %v46 = vcvt.s32.f32 %v42
    %v47 = vand.u32 %v33, 63
    %v48 = vcvt.s32.f32 %v47
    %s49 = sld [smem:[#allocation2]]
    %s50 = sld [smem:[#allocation2 + $0x1]]
    %s51 = sld [smem:[#allocation2 + $0x2]]
    %s52 = sld [smem:[#allocation2 + $0x3]]
    %s53 = sld [smem:[#allocation2 + $0x4]]
    %s54 = sld [smem:[#allocation2 + $0x5]]
    %s55 = sld [smem:[#allocation2 + $0x6]]
    %s56 = sld [smem:[#allocation2 + $0x7]]
    %s57 = sld [smem:[#allocation2 + $0x8]]
    %v58 = vstv %s49
    %v59 = vmul.f32 %v58, %v43
    %v60 = vmul.f32 %v58, %v44
    %v61 = vmul.f32 %v58, %v45
    %v62 = vmul.f32 %v58, %v46
    %v63 = vstv %s50
    %v64 = vmul.f32 %v63, %v48
    %v65 = vadd.f32 %v59, %v64
    %v66 = vadd.f32 %v60, %v64
    %v67 = vadd.f32 %v61, %v64
    %v68 = vadd.f32 %v62, %v64
    %v69 = vstv %s51
    %v70 = vadd.f32 %v65, %v69
    %v71 = vadd.f32 %v66, %v69
    %v72 = vadd.f32 %v67, %v69
    %v73 = vadd.f32 %v68, %v69
    %v74 = vstv %s52
    %v75 = vmul.f32 %v74, %v43
    %v76 = vmul.f32 %v74, %v44
    %v77 = vmul.f32 %v74, %v45
    %v78 = vmul.f32 %v74, %v46
    %v79 = vstv %s53
    %v80 = vmul.f32 %v79, %v48
    %v81 = vadd.f32 %v75, %v80
    %v82 = vadd.f32 %v76, %v80
    %v83 = vadd.f32 %v77, %v80
    %v84 = vadd.f32 %v78, %v80
    %v85 = vstv %s54
    %v86 = vadd.f32 %v81, %v85
    %v87 = vadd.f32 %v82, %v85
    %v88 = vadd.f32 %v83, %v85
    %v89 = vadd.f32 %v84, %v85
    %v90 = vstv %s55
    %v91 = vmul.f32 %v90, %v43
    %v92 = vmul.f32 %v90, %v44
    %v93 = vmul.f32 %v90, %v45
    %v94 = vmul.f32 %v90, %v46
    %v95 = vstv %s56
    %v96 = vmul.f32 %v95, %v48
    %v97 = vadd.f32 %v91, %v96
    %v98 = vadd.f32 %v92, %v96
    %v99 = vadd.f32 %v93, %v96
    %v100 = vadd.f32 %v94, %v96
    %v101 = vstv %s57
    %v102 = vadd.f32 %v97, %v101
    %v103 = vadd.f32 %v98, %v101
    %v104 = vadd.f32 %v99, %v101
    %v105 = vadd.f32 %v100, %v101
    %v106 = vmin.f32 %v70, %v86
    %v107 = vmin.f32 %v71, %v87
    %v108 = vmin.f32 %v72, %v88
    %v109 = vmin.f32 %v73, %v89
    %v110 = vmin.f32 %v106, %v102
    %v111 = vmin.f32 %v107, %v103
    %v112 = vmin.f32 %v108, %v104
    %v113 = vmin.f32 %v109, %v105
    %s114 = sld [smem:[#allocation2 + $0x9]]
    %s115 = sld [smem:[#allocation2 + $0xa]]
    %s116 = sld [smem:[#allocation2 + $0xb]]
    %s117 = sld [smem:[#allocation2 + $0xc]]
    %s118 = sld [smem:[#allocation2 + $0xd]]
    %s119 = sld [smem:[#allocation2 + $0xe]]
    %s120 = sld [smem:[#allocation2 + $0xf]]
    %s121 = sld [smem:[#allocation2 + $0x10]]
    %s122 = sld [smem:[#allocation2 + $0x11]]
    %v123 = vstv %s114
    %v124 = vmul.f32 %v123, %v43
    %v125 = vmul.f32 %v123, %v44
    %v126 = vmul.f32 %v123, %v45
    %v127 = vmul.f32 %v123, %v46
    %v128 = vstv %s115
    %v129 = vmul.f32 %v128, %v48
    %v130 = vadd.f32 %v124, %v129
    %v131 = vadd.f32 %v125, %v129
    %v132 = vadd.f32 %v126, %v129
    %v133 = vadd.f32 %v127, %v129
    %v134 = vstv %s116
    %v135 = vadd.f32 %v130, %v134
    %v136 = vadd.f32 %v131, %v134
    %v137 = vadd.f32 %v132, %v134
    %v138 = vadd.f32 %v133, %v134
    %v139 = vstv %s117
    %v140 = vmul.f32 %v139, %v43
    %v141 = vmul.f32 %v139, %v44
    %v142 = vmul.f32 %v139, %v45
    %v143 = vmul.f32 %v139, %v46
    %v144 = vstv %s118
    %v145 = vmul.f32 %v144, %v48
    %v146 = vadd.f32 %v140, %v145
    %v147 = vadd.f32 %v141, %v145
    %v148 = vadd.f32 %v142, %v145
    %v149 = vadd.f32 %v143, %v145
    %v150 = vstv %s119
    %v151 = vadd.f32 %v146, %v150
    %v152 = vadd.f32 %v147, %v150
    %v153 = vadd.f32 %v148, %v150
    %v154 = vadd.f32 %v149, %v150
    %v155 = vstv %s120
    %v156 = vmul.f32 %v155, %v43
    %v157 = vmul.f32 %v155, %v44
    %v158 = vmul.f32 %v155, %v45
    %v159 = vmul.f32 %v155, %v46
    %v160 = vstv %s121
    %v161 = vmul.f32 %v160, %v48
    %v162 = vadd.f32 %v156, %v161
    %v163 = vadd.f32 %v157, %v161
    %v164 = vadd.f32 %v158, %v161
    %v165 = vadd.f32 %v159, %v161
    %v166 = vstv %s122
    %v167 = vadd.f32 %v162, %v166
    %v168 = vadd.f32 %v163, %v166
    %v169 = vadd.f32 %v164, %v166
    %v170 = vadd.f32 %v165, %v166
    %v171 = vmin.f32 %v135, %v151
    %v172 = vmin.f32 %v136, %v152
    %v173 = vmin.f32 %v137, %v153
    %v174 = vmin.f32 %v138, %v154
    %v175 = vmin.f32 %v171, %v167
    %v176 = vmin.f32 %v172, %v168
    %v177 = vmin.f32 %v173, %v169
    %v178 = vmin.f32 %v174, %v170
    %v179 = vmax.f32 %v110, %v175
    %v180 = vmax.f32 %v111, %v176
    %v181 = vmax.f32 %v112, %v177
    %v182 = vmax.f32 %v113, %v178
    %s183 = sld [smem:[#allocation2 + $0x12]]
    %s184 = sld [smem:[#allocation2 + $0x13]]
    %s185 = sld [smem:[#allocation2 + $0x14]]
    %s186 = sld [smem:[#allocation2 + $0x15]]
    %s187 = sld [smem:[#allocation2 + $0x16]]
    %s188 = sld [smem:[#allocation2 + $0x17]]
    %s189 = sld [smem:[#allocation2 + $0x18]]
    %s190 = sld [smem:[#allocation2 + $0x19]]
    %s191 = sld [smem:[#allocation2 + $0x1a]]
    %v192 = vstv %s183
    %v193 = vmul.f32 %v192, %v43
    %v194 = vmul.f32 %v192, %v44
    %v195 = vmul.f32 %v192, %v45
    %v196 = vmul.f32 %v192, %v46
    %v197 = vstv %s184
    %v198 = vmul.f32 %v197, %v48
    %v199 = vadd.f32 %v193, %v198
    %v200 = vadd.f32 %v194, %v198
    %v201 = vadd.f32 %v195, %v198
    %v202 = vadd.f32 %v196, %v198
    %v203 = vstv %s185
    %v204 = vadd.f32 %v199, %v203
    %v205 = vadd.f32 %v200, %v203
    %v206 = vadd.f32 %v201, %v203
    %v207 = vadd.f32 %v202, %v203
    %v208 = vstv %s186
    %v209 = vmul.f32 %v208, %v43
    %v210 = vmul.f32 %v208, %v44
    %v211 = vmul.f32 %v208, %v45
    %v212 = vmul.f32 %v208, %v46
    %v213 = vstv %s187
    %v214 = vmul.f32 %v213, %v48
    %v215 = vadd.f32 %v209, %v214
    %v216 = vadd.f32 %v210, %v214
    %v217 = vadd.f32 %v211, %v214
    %v218 = vadd.f32 %v212, %v214
    %v219 = vstv %s188
    %v220 = vadd.f32 %v215, %v219
    %v221 = vadd.f32 %v216, %v219
    %v222 = vadd.f32 %v217, %v219
    %v223 = vadd.f32 %v218, %v219
    %v224 = vstv %s189
    %v225 = vmul.f32 %v224, %v43
    %v226 = vmul.f32 %v224, %v44
    %v227 = vmul.f32 %v224, %v45
    %v228 = vmul.f32 %v224, %v46
    %v229 = vstv %s190
    %v230 = vmul.f32 %v229, %v48
    %v231 = vadd.f32 %v225, %v230
    %v232 = vadd.f32 %v226, %v230
    %v233 = vadd.f32 %v227, %v230
    %v234 = vadd.f32 %v228, %v230
    %v235 = vstv %s191
    %v236 = vadd.f32 %v231, %v235
    %v237 = vadd.f32 %v232, %v235
    %v238 = vadd.f32 %v233, %v235
    %v239 = vadd.f32 %v234, %v235
    %v240 = vmin.f32 %v204, %v220
    %v241 = vmin.f32 %v205, %v221
    %v242 = vmin.f32 %v206, %v222
    %v243 = vmin.f32 %v207, %v223
    %v244 = vmin.f32 %v240, %v236
    %v245 = vmin.f32 %v241, %v237
    %v246 = vmin.f32 %v242, %v238
    %v247 = vmin.f32 %v243, %v239
    %v248 = vmax.f32 %v179, %v244
    %v249 = vmax.f32 %v180, %v245
    %v250 = vmax.f32 %v181, %v246
    %v251 = vmax.f32 %v182, %v247
    %s252 = sld [smem:[#allocation2 + $0x1b]]
    %s253 = sld [smem:[#allocation2 + $0x1c]]
    %s254 = sld [smem:[#allocation2 + $0x1d]]
    %s255 = sld [smem:[#allocation2 + $0x1e]]
    %s256 = sld [smem:[#allocation2 + $0x1f]]
    %s257 = sld [smem:[#allocation2 + $0x20]]
    %s258 = sld [smem:[#allocation2 + $0x21]]
    %s259 = sld [smem:[#allocation2 + $0x22]]
    %s260 = sld [smem:[#allocation2 + $0x23]]
    %v261 = vstv %s252
    %v262 = vmul.f32 %v261, %v43
    %v263 = vmul.f32 %v261, %v44
    %v264 = vmul.f32 %v261, %v45
    %v265 = vmul.f32 %v261, %v46
    %v266 = vstv %s253
    %v267 = vmul.f32 %v266, %v48
    %v268 = vadd.f32 %v262, %v267
    %v269 = vadd.f32 %v263, %v267
    %v270 = vadd.f32 %v264, %v267
    %v271 = vadd.f32 %v265, %v267
    %v272 = vstv %s254
    %v273 = vadd.f32 %v268, %v272
    %v274 = vadd.f32 %v269, %v272
    %v275 = vadd.f32 %v270, %v272
    %v276 = vadd.f32 %v271, %v272
    %v277 = vstv %s255
    %v278 = vmul.f32 %v277, %v43
    %v279 = vmul.f32 %v277, %v44
    %v280 = vmul.f32 %v277, %v45
    %v281 = vmul.f32 %v277, %v46
    %v282 = vstv %s256
    %v283 = vmul.f32 %v282, %v48
    %v284 = vadd.f32 %v278, %v283
    %v285 = vadd.f32 %v279, %v283
    %v286 = vadd.f32 %v280, %v283
    %v287 = vadd.f32 %v281, %v283
    %v288 = vstv %s257
    %v289 = vadd.f32 %v284, %v288
    %v290 = vadd.f32 %v285, %v288
    %v291 = vadd.f32 %v286, %v288
    %v292 = vadd.f32 %v287, %v288
    %v293 = vstv %s258
    %v294 = vmul.f32 %v293, %v43
    %v295 = vmul.f32 %v293, %v44
    %v296 = vmul.f32 %v293, %v45
    %v297 = vmul.f32 %v293, %v46
    %v298 = vstv %s259
    %v299 = vmul.f32 %v298, %v48
    %v300 = vadd.f32 %v294, %v299
    %v301 = vadd.f32 %v295, %v299
    %v302 = vadd.f32 %v296, %v299
    %v303 = vadd.f32 %v297, %v299
    %v304 = vstv %s260
    %v305 = vadd.f32 %v300, %v304
    %v306 = vadd.f32 %v301, %v304
    %v307 = vadd.f32 %v302, %v304
    %v308 = vadd.f32 %v303, %v304
    %v309 = vmin.f32 %v273, %v289
    %v310 = vmin.f32 %v274, %v290
    %v311 = vmin.f32 %v275, %v291
    %v312 = vmin.f32 %v276, %v292
    %v313 = vmin.f32 %v309, %v305
    %v314 = vmin.f32 %v310, %v306
    %v315 = vmin.f32 %v311, %v307
    %v316 = vmin.f32 %v312, %v308
    %v317 = vmax.f32 %v248, %v313
    %v318 = vmax.f32 %v249, %v314
    %v319 = vmax.f32 %v250, %v315
    %v320 = vmax.f32 %v251, %v316
    %s321 = sld [smem:[#allocation2 + $0x24]]
    %s322 = sld [smem:[#allocation2 + $0x25]]
    %s323 = sld [smem:[#allocation2 + $0x26]]
    %s324 = sld [smem:[#allocation2 + $0x27]]
    %s325 = sld [smem:[#allocation2 + $0x28]]
    %s326 = sld [smem:[#allocation2 + $0x29]]
    %s327 = sld [smem:[#allocation2 + $0x2a]]
    %s328 = sld [smem:[#allocation2 + $0x2b]]
    %s329 = sld [smem:[#allocation2 + $0x2c]]
    %v330 = vstv %s321
    %v331 = vmul.f32 %v330, %v43
    %v332 = vmul.f32 %v330, %v44
    %v333 = vmul.f32 %v330, %v45
    %v334 = vmul.f32 %v330, %v46
    %v335 = vstv %s322
    %v336 = vmul.f32 %v335, %v48
    %v337 = vadd.f32 %v331, %v336
    %v338 = vadd.f32 %v332, %v336
    %v339 = vadd.f32 %v333, %v336
    %v340 = vadd.f32 %v334, %v336
    %v341 = vstv %s323
    %v342 = vadd.f32 %v337, %v341
    %v343 = vadd.f32 %v338, %v341
    %v344 = vadd.f32 %v339, %v341
    %v345 = vadd.f32 %v340, %v341
    %v346 = vstv %s324
    %v347 = vmul.f32 %v346, %v43
    %v348 = vmul.f32 %v346, %v44
    %v349 = vmul.f32 %v346, %v45
    %v350 = vmul.f32 %v346, %v46
    %v351 = vstv %s325
    %v352 = vmul.f32 %v351, %v48
    %v353 = vadd.f32 %v347, %v352
    %v354 = vadd.f32 %v348, %v352
    %v355 = vadd.f32 %v349, %v352
    %v356 = vadd.f32 %v350, %v352
    %v357 = vstv %s326
    %v358 = vadd.f32 %v353, %v357
    %v359 = vadd.f32 %v354, %v357
    %v360 = vadd.f32 %v355, %v357
    %v361 = vadd.f32 %v356, %v357
    %v362 = vstv %s327
    %v363 = vmul.f32 %v362, %v43
    %v364 = vmul.f32 %v362, %v44
    %v365 = vmul.f32 %v362, %v45
    %v366 = vmul.f32 %v362, %v46
    %v367 = vstv %s328
    %v368 = vmul.f32 %v367, %v48
    %v369 = vadd.f32 %v363, %v368
    %v370 = vadd.f32 %v364, %v368
    %v371 = vadd.f32 %v365, %v368
    %v372 = vadd.f32 %v366, %v368
    %v373 = vstv %s329
    %v374 = vadd.f32 %v369, %v373
    %v375 = vadd.f32 %v370, %v373
    %v376 = vadd.f32 %v371, %v373
    %v377 = vadd.f32 %v372, %v373
    %v378 = vmin.f32 %v342, %v358
    %v379 = vmin.f32 %v343, %v359
    %v380 = vmin.f32 %v344, %v360
    %v381 = vmin.f32 %v345, %v361
    %v382 = vmin.f32 %v378, %v374
    %v383 = vmin.f32 %v379, %v375
    %v384 = vmin.f32 %v380, %v376
    %v385 = vmin.f32 %v381, %v377
    %v386 = vmax.f32 %v317, %v382
    %v387 = vmax.f32 %v318, %v383
    %v388 = vmax.f32 %v319, %v384
    %v389 = vmax.f32 %v320, %v385
    %s390 = sld [smem:[#allocation2 + $0x2d]]
    %s391 = sld [smem:[#allocation2 + $0x2e]]
    %s392 = sld [smem:[#allocation2 + $0x2f]]
    %s393 = sld [smem:[#allocation2 + $0x30]]
    %s394 = sld [smem:[#allocation2 + $0x31]]
    %s395 = sld [smem:[#allocation2 + $0x32]]
    %s396 = sld [smem:[#allocation2 + $0x33]]
    %s397 = sld [smem:[#allocation2 + $0x34]]
    %s398 = sld [smem:[#allocation2 + $0x35]]
    %v399 = vstv %s390
    %v400 = vmul.f32 %v399, %v43
    %v401 = vmul.f32 %v399, %v44
    %v402 = vmul.f32 %v399, %v45
    %v403 = vmul.f32 %v399, %v46
    %v404 = vstv %s391
    %v405 = vmul.f32 %v404, %v48
    %v406 = vadd.f32 %v400, %v405
    %v407 = vadd.f32 %v401, %v405
    %v408 = vadd.f32 %v402, %v405
    %v409 = vadd.f32 %v403, %v405
    %v410 = vstv %s392
    %v411 = vadd.f32 %v406, %v410
    %v412 = vadd.f32 %v407, %v410
    %v413 = vadd.f32 %v408, %v410
    %v414 = vadd.f32 %v409, %v410
    %v415 = vstv %s393
    %v416 = vmul.f32 %v415, %v43
    %v417 = vmul.f32 %v415, %v44
    %v418 = vmul.f32 %v415, %v45
    %v419 = vmul.f32 %v415, %v46
    %v420 = vstv %s394
    %v421 = vmul.f32 %v420, %v48
    %v422 = vadd.f32 %v416, %v421
    %v423 = vadd.f32 %v417, %v421
    %v424 = vadd.f32 %v418, %v421
    %v425 = vadd.f32 %v419, %v421
    %v426 = vstv %s395
    %v427 = vadd.f32 %v422, %v426
    %v428 = vadd.f32 %v423, %v426
    %v429 = vadd.f32 %v424, %v426
    %v430 = vadd.f32 %v425, %v426
    %v431 = vstv %s396
    %v432 = vmul.f32 %v431, %v43
    %v433 = vmul.f32 %v431, %v44
    %v434 = vmul.f32 %v431, %v45
    %v435 = vmul.f32 %v431, %v46
    %v436 = vstv %s397
    %v437 = vmul.f32 %v436, %v48
    %v438 = vadd.f32 %v432, %v437
    %v439 = vadd.f32 %v433, %v437
    %v440 = vadd.f32 %v434, %v437
    %v441 = vadd.f32 %v435, %v437
    %v442 = vstv %s398
    %v443 = vadd.f32 %v438, %v442
    %v444 = vadd.f32 %v439, %v442
    %v445 = vadd.f32 %v440, %v442
    %v446 = vadd.f32 %v441, %v442
    %v447 = vmin.f32 %v411, %v427
    %v448 = vmin.f32 %v412, %v428
    %v449 = vmin.f32 %v413, %v429
    %v450 = vmin.f32 %v414, %v430
    %v451 = vmin.f32 %v447, %v443
    %v452 = vmin.f32 %v448, %v444
    %v453 = vmin.f32 %v449, %v445
    %v454 = vmin.f32 %v450, %v446
    %v455 = vmax.f32 %v386, %v451
    %v456 = vmax.f32 %v387, %v452
    %v457 = vmax.f32 %v388, %v453
    %v458 = vmax.f32 %v389, %v454
    %s459 = sld [smem:[#allocation2 + $0x36]]
    %s460 = sld [smem:[#allocation2 + $0x37]]
    %s461 = sld [smem:[#allocation2 + $0x38]]
    %s462 = sld [smem:[#allocation2 + $0x39]]
    %s463 = sld [smem:[#allocation2 + $0x3a]]
    %s464 = sld [smem:[#allocation2 + $0x3b]]
    %s465 = sld [smem:[#allocation2 + $0x3c]]
    %s466 = sld [smem:[#allocation2 + $0x3d]]
    %s467 = sld [smem:[#allocation2 + $0x3e]]
    %v468 = vstv %s459
    %v469 = vmul.f32 %v468, %v43
    %v470 = vmul.f32 %v468, %v44
    %v471 = vmul.f32 %v468, %v45
    %v472 = vmul.f32 %v468, %v46
    %v473 = vstv %s460
    %v474 = vmul.f32 %v473, %v48
    %v475 = vadd.f32 %v469, %v474
    %v476 = vadd.f32 %v470, %v474
    %v477 = vadd.f32 %v471, %v474
    %v478 = vadd.f32 %v472, %v474
    %v479 = vstv %s461
    %v480 = vadd.f32 %v475, %v479
    %v481 = vadd.f32 %v476, %v479
    %v482 = vadd.f32 %v477, %v479
    %v483 = vadd.f32 %v478, %v479
    %v484 = vstv %s462
    %v485 = vmul.f32 %v484, %v43
    %v486 = vmul.f32 %v484, %v44
    %v487 = vmul.f32 %v484, %v45
    %v488 = vmul.f32 %v484, %v46
    %v489 = vstv %s463
    %v490 = vmul.f32 %v489, %v48
    %v491 = vadd.f32 %v485, %v490
    %v492 = vadd.f32 %v486, %v490
    %v493 = vadd.f32 %v487, %v490
    %v494 = vadd.f32 %v488, %v490
    %v495 = vstv %s464
    %v496 = vadd.f32 %v491, %v495
    %v497 = vadd.f32 %v492, %v495
    %v498 = vadd.f32 %v493, %v495
    %v499 = vadd.f32 %v494, %v495
    %v500 = vstv %s465
    %v501 = vmul.f32 %v500, %v43
    %v502 = vmul.f32 %v500, %v44
    %v503 = vmul.f32 %v500, %v45
    %v504 = vmul.f32 %v500, %v46
    %v505 = vstv %s466
    %v506 = vmul.f32 %v505, %v48
    %v507 = vadd.f32 %v501, %v506
    %v508 = vadd.f32 %v502, %v506
    %v509 = vadd.f32 %v503, %v506
    %v510 = vadd.f32 %v504, %v506
    %v511 = vstv %s467
    %v512 = vadd.f32 %v507, %v511
    %v513 = vadd.f32 %v508, %v511
    %v514 = vadd.f32 %v509, %v511
    %v515 = vadd.f32 %v510, %v511
    %v516 = vmin.f32 %v480, %v496
    %v517 = vmin.f32 %v481, %v497
    %v518 = vmin.f32 %v482, %v498
    %v519 = vmin.f32 %v483, %v499
    %v520 = vmin.f32 %v516, %v512
    %v521 = vmin.f32 %v517, %v513
    %v522 = vmin.f32 %v518, %v514
    %v523 = vmin.f32 %v519, %v515
    %v524 = vmax.f32 %v455, %v520
    %v525 = vmax.f32 %v456, %v521
    %v526 = vmax.f32 %v457, %v522
    %v527 = vmax.f32 %v458, %v523
    %s528 = sld [smem:[#allocation2 + $0x3f]]
    %s529 = sld [smem:[#allocation2 + $0x40]]
    %s530 = sld [smem:[#allocation2 + $0x41]]
    %s531 = sld [smem:[#allocation2 + $0x42]]
    %s532 = sld [smem:[#allocation2 + $0x43]]
    %s533 = sld [smem:[#allocation2 + $0x44]]
    %s534 = sld [smem:[#allocation2 + $0x45]]
    %s535 = sld [smem:[#allocation2 + $0x46]]
    %s536 = sld [smem:[#allocation2 + $0x47]]
    %v537 = vstv %s528
    %v538 = vmul.f32 %v537, %v43
    %v539 = vmul.f32 %v537, %v44
    %v540 = vmul.f32 %v537, %v45
    %v541 = vmul.f32 %v537, %v46
    %v542 = vstv %s529
    %v543 = vmul.f32 %v542, %v48
    %v544 = vadd.f32 %v538, %v543
    %v545 = vadd.f32 %v539, %v543
    %v546 = vadd.f32 %v540, %v543
    %v547 = vadd.f32 %v541, %v543
    %v548 = vstv %s530
    %v549 = vadd.f32 %v544, %v548
    %v550 = vadd.f32 %v545, %v548
    %v551 = vadd.f32 %v546, %v548
    %v552 = vadd.f32 %v547, %v548
    %v553 = vstv %s531
    %v554 = vmul.f32 %v553, %v43
    %v555 = vmul.f32 %v553, %v44
    %v556 = vmul.f32 %v553, %v45
    %v557 = vmul.f32 %v553, %v46
    %v558 = vstv %s532
    %v559 = vmul.f32 %v558, %v48
    %v560 = vadd.f32 %v554, %v559
    %v561 = vadd.f32 %v555, %v559
    %v562 = vadd.f32 %v556, %v559
    %v563 = vadd.f32 %v557, %v559
    %v564 = vstv %s533
    %v565 = vadd.f32 %v560, %v564
    %v566 = vadd.f32 %v561, %v564
    %v567 = vadd.f32 %v562, %v564
    %v568 = vadd.f32 %v563, %v564
    %v569 = vstv %s534
    %v570 = vmul.f32 %v569, %v43
    %v571 = vmul.f32 %v569, %v44
    %v572 = vmul.f32 %v569, %v45
    %v573 = vmul.f32 %v569, %v46
    %v574 = vstv %s535
    %v575 = vmul.f32 %v574, %v48
    %v576 = vadd.f32 %v570, %v575
    %v577 = vadd.f32 %v571, %v575
    %v578 = vadd.f32 %v572, %v575
    %v579 = vadd.f32 %v573, %v575
    %v580 = vstv %s536
    %v581 = vadd.f32 %v576, %v580
    %v582 = vadd.f32 %v577, %v580
    %v583 = vadd.f32 %v578, %v580
    %v584 = vadd.f32 %v579, %v580
    %v585 = vmin.f32 %v549, %v565
    %v586 = vmin.f32 %v550, %v566
    %v587 = vmin.f32 %v551, %v567
    %v588 = vmin.f32 %v552, %v568
    %v589 = vmin.f32 %v585, %v581
    %v590 = vmin.f32 %v586, %v582
    %v591 = vmin.f32 %v587, %v583
    %v592 = vmin.f32 %v588, %v584
    %v593 = vmax.f32 %v524, %v589
    %v594 = vmax.f32 %v525, %v590
    %v595 = vmax.f32 %v526, %v591
    %v596 = vmax.f32 %v527, %v592
    %s597 = sld [smem:[#allocation2 + $0x48]]
    %s598 = sld [smem:[#allocation2 + $0x49]]
    %s599 = sld [smem:[#allocation2 + $0x4a]]
    %s600 = sld [smem:[#allocation2 + $0x4b]]
    %s601 = sld [smem:[#allocation2 + $0x4c]]
    %s602 = sld [smem:[#allocation2 + $0x4d]]
    %s603 = sld [smem:[#allocation2 + $0x4e]]
    %s604 = sld [smem:[#allocation2 + $0x4f]]
    %s605 = sld [smem:[#allocation2 + $0x50]]
    %v606 = vstv %s597
    %v607 = vmul.f32 %v606, %v43
    %v608 = vmul.f32 %v606, %v44
    %v609 = vmul.f32 %v606, %v45
    %v610 = vmul.f32 %v606, %v46
    %v611 = vstv %s598
    %v612 = vmul.f32 %v611, %v48
    %v613 = vadd.f32 %v607, %v612
    %v614 = vadd.f32 %v608, %v612
    %v615 = vadd.f32 %v609, %v612
    %v616 = vadd.f32 %v610, %v612
    %v617 = vstv %s599
    %v618 = vadd.f32 %v613, %v617
    %v619 = vadd.f32 %v614, %v617
    %v620 = vadd.f32 %v615, %v617
    %v621 = vadd.f32 %v616, %v617
    %v622 = vstv %s600
    %v623 = vmul.f32 %v622, %v43
    %v624 = vmul.f32 %v622, %v44
    %v625 = vmul.f32 %v622, %v45
    %v626 = vmul.f32 %v622, %v46
    %v627 = vstv %s601
    %v628 = vmul.f32 %v627, %v48
    %v629 = vadd.f32 %v623, %v628
    %v630 = vadd.f32 %v624, %v628
    %v631 = vadd.f32 %v625, %v628
    %v632 = vadd.f32 %v626, %v628
    %v633 = vstv %s602
    %v634 = vadd.f32 %v629, %v633
    %v635 = vadd.f32 %v630, %v633
    %v636 = vadd.f32 %v631, %v633
    %v637 = vadd.f32 %v632, %v633
    %v638 = vstv %s603
    %v639 = vmul.f32 %v638, %v43
    %v640 = vmul.f32 %v638, %v44
    %v641 = vmul.f32 %v638, %v45
    %v642 = vmul.f32 %v638, %v46
    %v643 = vstv %s604
    %v644 = vmul.f32 %v643, %v48
    %v645 = vadd.f32 %v639, %v644
    %v646 = vadd.f32 %v640, %v644
    %v647 = vadd.f32 %v641, %v644
    %v648 = vadd.f32 %v642, %v644
    %v649 = vstv %s605
    %v650 = vadd.f32 %v645, %v649
    %v651 = vadd.f32 %v646, %v649
    %v652 = vadd.f32 %v647, %v649
    %v653 = vadd.f32 %v648, %v649
    %v654 = vmin.f32 %v618, %v634
    %v655 = vmin.f32 %v619, %v635
    %v656 = vmin.f32 %v620, %v636
    %v657 = vmin.f32 %v621, %v637
    %v658 = vmin.f32 %v654, %v650
    %v659 = vmin.f32 %v655, %v651
    %v660 = vmin.f32 %v656, %v652
    %v661 = vmin.f32 %v657, %v653
    %v662 = vmax.f32 %v593, %v658
    %v663 = vmax.f32 %v594, %v659
    %v664 = vmax.f32 %v595, %v660
    %v665 = vmax.f32 %v596, %v661
    %s666 = sld [smem:[#allocation2 + $0x51]]
    %s667 = sld [smem:[#allocation2 + $0x52]]
    %s668 = sld [smem:[#allocation2 + $0x53]]
    %s669 = sld [smem:[#allocation2 + $0x54]]
    %s670 = sld [smem:[#allocation2 + $0x55]]
    %s671 = sld [smem:[#allocation2 + $0x56]]
    %s672 = sld [smem:[#allocation2 + $0x57]]
    %s673 = sld [smem:[#allocation2 + $0x58]]
    %s674 = sld [smem:[#allocation2 + $0x59]]
    %v675 = vstv %s666
    %v676 = vmul.f32 %v675, %v43
    %v677 = vmul.f32 %v675, %v44
    %v678 = vmul.f32 %v675, %v45
    %v679 = vmul.f32 %v675, %v46
    %v680 = vstv %s667
    %v681 = vmul.f32 %v680, %v48
    %v682 = vadd.f32 %v676, %v681
    %v683 = vadd.f32 %v677, %v681
    %v684 = vadd.f32 %v678, %v681
    %v685 = vadd.f32 %v679, %v681
    %v686 = vstv %s668
    %v687 = vadd.f32 %v682, %v686
    %v688 = vadd.f32 %v683, %v686
    %v689 = vadd.f32 %v684, %v686
    %v690 = vadd.f32 %v685, %v686
    %v691 = vstv %s669
    %v692 = vmul.f32 %v691, %v43
    %v693 = vmul.f32 %v691, %v44
    %v694 = vmul.f32 %v691, %v45
    %v695 = vmul.f32 %v691, %v46
    %v696 = vstv %s670
    %v697 = vmul.f32 %v696, %v48
    %v698 = vadd.f32 %v692, %v697
    %v699 = vadd.f32 %v693, %v697
    %v700 = vadd.f32 %v694, %v697
    %v701 = vadd.f32 %v695, %v697
    %v702 = vstv %s671
    %v703 = vadd.f32 %v698, %v702
    %v704 = vadd.f32 %v699, %v702
    %v705 = vadd.f32 %v700, %v702
    %v706 = vadd.f32 %v701, %v702
    %v707 = vstv %s672
    %v708 = vmul.f32 %v707, %v43
    %v709 = vmul.f32 %v707, %v44
    %v710 = vmul.f32 %v707, %v45
    %v711 = vmul.f32 %v707, %v46
    %v712 = vstv %s673
    %v713 = vmul.f32 %v712, %v48
    %v714 = vadd.f32 %v708, %v713
    %v715 = vadd.f32 %v709, %v713
    %v716 = vadd.f32 %v710, %v713
    %v717 = vadd.f32 %v711, %v713
    %v718 = vstv %s674
    %v719 = vadd.f32 %v714, %v718
    %v720 = vadd.f32 %v715, %v718
    %v721 = vadd.f32 %v716, %v718
    %v722 = vadd.f32 %v717, %v718
    %v723 = vmin.f32 %v687, %v703
    %v724 = vmin.f32 %v688, %v704
    %v725 = vmin.f32 %v689, %v705
    %v726 = vmin.f32 %v690, %v706
    %v727 = vmin.f32 %v723, %v719
    %v728 = vmin.f32 %v724, %v720
    %v729 = vmin.f32 %v725, %v721
    %v730 = vmin.f32 %v726, %v722
    %v731 = vmax.f32 %v662, %v727
    %v732 = vmax.f32 %v663, %v728
    %v733 = vmax.f32 %v664, %v729
    %v734 = vmax.f32 %v665, %v730
    %s735 = sld [smem:[#allocation2 + $0x5a]]
    %s736 = sld [smem:[#allocation2 + $0x5b]]
    %s737 = sld [smem:[#allocation2 + $0x5c]]
    %s738 = sld [smem:[#allocation2 + $0x5d]]
    %s739 = sld [smem:[#allocation2 + $0x5e]]
    %s740 = sld [smem:[#allocation2 + $0x5f]]
    %s741 = sld [smem:[#allocation2 + $0x60]]
    %s742 = sld [smem:[#allocation2 + $0x61]]
    %s743 = sld [smem:[#allocation2 + $0x62]]
    %v744 = vstv %s735
    %v745 = vmul.f32 %v744, %v43
    %v746 = vmul.f32 %v744, %v44
    %v747 = vmul.f32 %v744, %v45
    %v748 = vmul.f32 %v744, %v46
    %v749 = vstv %s736
    %v750 = vmul.f32 %v749, %v48
    %v751 = vadd.f32 %v745, %v750
    %v752 = vadd.f32 %v746, %v750
    %v753 = vadd.f32 %v747, %v750
    %v754 = vadd.f32 %v748, %v750
    %v755 = vstv %s737
    %v756 = vadd.f32 %v751, %v755
    %v757 = vadd.f32 %v752, %v755
    %v758 = vadd.f32 %v753, %v755
    %v759 = vadd.f32 %v754, %v755
    %v760 = vstv %s738
    %v761 = vmul.f32 %v760, %v43
    %v762 = vmul.f32 %v760, %v44
    %v763 = vmul.f32 %v760, %v45
    %v764 = vmul.f32 %v760, %v46
    %v765 = vstv %s739
    %v766 = vmul.f32 %v765, %v48
    %v767 = vadd.f32 %v761, %v766
    %v768 = vadd.f32 %v762, %v766
    %v769 = vadd.f32 %v763, %v766
    %v770 = vadd.f32 %v764, %v766
    %v771 = vstv %s740
    %v772 = vadd.f32 %v767, %v771
    %v773 = vadd.f32 %v768, %v771
    %v774 = vadd.f32 %v769, %v771
    %v775 = vadd.f32 %v770, %v771
    %v776 = vstv %s741
    %v777 = vmul.f32 %v776, %v43
    %v778 = vmul.f32 %v776, %v44
    %v779 = vmul.f32 %v776, %v45
    %v780 = vmul.f32 %v776, %v46
    %v781 = vstv %s742
    %v782 = vmul.f32 %v781, %v48
    %v783 = vadd.f32 %v777, %v782
    %v784 = vadd.f32 %v778, %v782
    %v785 = vadd.f32 %v779, %v782
    %v786 = vadd.f32 %v780, %v782
    %v787 = vstv %s743
    %v788 = vadd.f32 %v783, %v787
    %v789 = vadd.f32 %v784, %v787
    %v790 = vadd.f32 %v785, %v787
    %v791 = vadd.f32 %v786, %v787
    %v792 = vmin.f32 %v756, %v772
    %v793 = vmin.f32 %v757, %v773
    %v794 = vmin.f32 %v758, %v774
    %v795 = vmin.f32 %v759, %v775
    %v796 = vmin.f32 %v792, %v788
    %v797 = vmin.f32 %v793, %v789
    %v798 = vmin.f32 %v794, %v790
    %v799 = vmin.f32 %v795, %v791
    %v800 = vmax.f32 %v731, %v796
    %v801 = vmax.f32 %v732, %v797
    %v802 = vmax.f32 %v733, %v798
    %v803 = vmax.f32 %v734, %v799
    %s804 = sld [smem:[#allocation2 + $0x63]]
    %s805 = sld [smem:[#allocation2 + $0x64]]
    %s806 = sld [smem:[#allocation2 + $0x65]]
    %s807 = sld [smem:[#allocation2 + $0x66]]
    %s808 = sld [smem:[#allocation2 + $0x67]]
    %s809 = sld [smem:[#allocation2 + $0x68]]
    %s810 = sld [smem:[#allocation2 + $0x69]]
    %s811 = sld [smem:[#allocation2 + $0x6a]]
    %s812 = sld [smem:[#allocation2 + $0x6b]]
    %v813 = vstv %s804
    %v814 = vmul.f32 %v813, %v43
    %v815 = vmul.f32 %v813, %v44
    %v816 = vmul.f32 %v813, %v45
    %v817 = vmul.f32 %v813, %v46
    %v818 = vstv %s805
    %v819 = vmul.f32 %v818, %v48
    %v820 = vadd.f32 %v814, %v819
    %v821 = vadd.f32 %v815, %v819
    %v822 = vadd.f32 %v816, %v819
    %v823 = vadd.f32 %v817, %v819
    %v824 = vstv %s806
    %v825 = vadd.f32 %v820, %v824
    %v826 = vadd.f32 %v821, %v824
    %v827 = vadd.f32 %v822, %v824
    %v828 = vadd.f32 %v823, %v824
    %v829 = vstv %s807
    %v830 = vmul.f32 %v829, %v43
    %v831 = vmul.f32 %v829, %v44
    %v832 = vmul.f32 %v829, %v45
    %v833 = vmul.f32 %v829, %v46
    %v834 = vstv %s808
    %v835 = vmul.f32 %v834, %v48
    %v836 = vadd.f32 %v830, %v835
    %v837 = vadd.f32 %v831, %v835
    %v838 = vadd.f32 %v832, %v835
    %v839 = vadd.f32 %v833, %v835
    %v840 = vstv %s809
    %v841 = vadd.f32 %v836, %v840
    %v842 = vadd.f32 %v837, %v840
    %v843 = vadd.f32 %v838, %v840
    %v844 = vadd.f32 %v839, %v840
    %v845 = vstv %s810
    %v846 = vmul.f32 %v845, %v43
    %v847 = vmul.f32 %v845, %v44
    %v848 = vmul.f32 %v845, %v45
    %v849 = vmul.f32 %v845, %v46
    %v850 = vstv %s811
    %v851 = vmul.f32 %v850, %v48
    %v852 = vadd.f32 %v846, %v851
    %v853 = vadd.f32 %v847, %v851
    %v854 = vadd.f32 %v848, %v851
    %v855 = vadd.f32 %v849, %v851
    %v856 = vstv %s812
    %v857 = vadd.f32 %v852, %v856
    %v858 = vadd.f32 %v853, %v856
    %v859 = vadd.f32 %v854, %v856
    %v860 = vadd.f32 %v855, %v856
    %v861 = vmin.f32 %v825, %v841
    %v862 = vmin.f32 %v826, %v842
    %v863 = vmin.f32 %v827, %v843
    %v864 = vmin.f32 %v828, %v844
    %v865 = vmin.f32 %v861, %v857
    %v866 = vmin.f32 %v862, %v858
    %v867 = vmin.f32 %v863, %v859
    %v868 = vmin.f32 %v864, %v860
    %v869 = vmax.f32 %v800, %v865
    %v870 = vmax.f32 %v801, %v866
    %v871 = vmax.f32 %v802, %v867
    %v872 = vmax.f32 %v803, %v868
    %vm873 = vcmp.ge.f32.partialorder %v869, 0.0
    %vm874 = vcmp.ge.f32.partialorder %v870, 0.0
    %vm875 = vcmp.ge.f32.partialorder %v871, 0.0
    %vm876 = vcmp.ge.f32.partialorder %v872, 0.0
    %v877 = vsel %vm873, 1, 0
    %v878 = vsel %vm874, 1, 0
    %v879 = vsel %vm875, 1, 0
    %v880 = vsel %vm876, 1, 0
    %v881 = vcvt.s32.f32 %v877
    %v882 = vcvt.s32.f32 %v878
    %v883 = vcvt.s32.f32 %v879
    %v884 = vcvt.s32.f32 %v880
    %885 = vst [vmem:[%s2] sm:$0xff] %v881
    %886 = vst [vmem:[%s2 + $0x8] sm:$0xff] %v882
    %887 = vst [vmem:[%s2 + $0x10] sm:$0xff] %v883
    %888 = vst [vmem:[%s2 + $0x18] sm:$0xff] %v884
    %v889 = vld [vmem:[%s1] sm:$0xff]
    %v890 = vld [vmem:[%s1 + $0x8] sm:$0xff]
    %v891 = vld [vmem:[%s1 + $0x10] sm:$0xff]
    %v892 = vld [vmem:[%s1 + $0x18] sm:$0xff]
    %v893 = vsub.f32 %v881, %v889
    %v894 = vsub.f32 %v882, %v890
    %v895 = vsub.f32 %v883, %v891
    %v896 = vsub.f32 %v884, %v892
    %v897 = vmul.f32 %v893, %v893
    %v898 = vmul.f32 %v894, %v894
    %v899 = vmul.f32 %v895, %v895
    %v900 = vmul.f32 %v896, %v896
    %v901 = vadd.f32 %v897, %v898
    %v902 = vadd.f32 %v901, %v899
    %v903 = vadd.f32 %v902, %v900
    %904 = vadd.xlane.f32.xlu0 %v903
    %v905 = vpop.xlane.xlu0 %904
    %v906 = vrot.slane %v905, 4
    %v907 = vadd.f32 %v905, %v906
    %v908 = vrot.slane %v907, 2
    %v909 = vadd.f32 %v907, %v908
    %v910 = vrot.slane %v909, 1
    %v911 = vadd.f32 %v909, %v910
    %s912 = vtos %v911
    %s913 = scalar_lea.smem [#allocation5], 0
    %914 = sst [smem:[%s913]] %s912
    // Predicated region
    $region14: #{forward.1} parent=1 // pred_check
      _
    $region15: #{forward.1} parent=1 // pred_check_branch
      %916 = sbr.rel (0) target = $region17
    $region16: #{forward.1} parent=1 // pred_region
      _
    $region17: #{forward.1} parent=1 // pred_fallthru
      _
    // Predicated region
    $region18: #{forward.1} parent=1 // pred_check
      _
    $region19: #{forward.1} parent=1 // pred_check_branch
      %918 = sbr.rel (0) target = $region21
    $region20: #{forward.1} parent=1 // pred_region
      %s920 = ssub.s32 16, 16
      %921 = vsyncadd [#allocation3], %s920
      %924 = dma.smem_to_hbm [#allocation5], 16, %s3, [#allocation3]
    $region21: #{forward.1} parent=1 // pred_fallthru
      _
    // Predicated region
    $region22: #{forward.1} parent=1 // pred_check
      _
    $region23: #{forward.1} parent=1 // pred_check_branch
      %926 = sbr.rel (0) target = $region25
    $region24: #{forward.1} parent=1 // pred_region
      _
    $region25: #{forward.1} parent=1 // pred_fallthru
      _
    // Predicated region
    $region26: #{forward.1} parent=1 // pred_check
      _
    $region27: #{forward.1} parent=1 // pred_check_branch
      %928 = sbr.rel (0) target = $region29
    $region28: #{forward.1} parent=1 // pred_region
      %929 = dma.done [#allocation3], 16
    $region29: #{forward.1} parent=1 // pred_fallthru
      _
    %930 = sfence
    %931 = vsyncpa [#allocation3], 1
    %932 = vsyncpa [#allocation4], 1

</llo_original>
